<compile_context>
chip_gen: v7x
topology: tpu7x:2x2x1
jax: 0.10.0
libtpu: 0.0.40
codegen_flags: <defaults>
</compile_context>

<pallas_src>
import math

import jax
import jax.numpy as jnp
from jax.experimental import pallas as pl
from jax.experimental.pallas import tpu as pltpu


def _round_up(n: int, m: int) -> int:
    return ((n + m - 1) // m) * m


def _vmem_budget_bytes() -> int:
    """~80% of this generation's VMEM (v5e/v6e: 128 MiB, v7x: 64 MiB/core)."""
    try:
        cap = int(pltpu.get_tpu_info().vmem_capacity_bytes)
    except Exception:
        cap = 64 * 1024 * 1024  # conservative fallback (v7x per-TensorCore)
    return int(cap * 0.8)


def _choose_batch_tile(B: int, bytes_per_row: int, weight_bytes: int,
                       vmem_budget: int) -> int:
    """Pick the batch tile: minimal padding, >=2 grid steps for mid/large
    batches (v7x megacore), big tiles on 128 MiB parts, shrunk to fit VMEM."""
    B8 = _round_up(B, 8)
    if B8 <= 256:
        tb = B8                                   # one full tile, no padding
    elif B8 <= 1024:
        tb = _round_up(pl.cdiv(B8, 2), 8)         # 2 steps, <=8 rows padding
    else:
        # Largest tile among {1024, 512, 256} that minimizes batch padding.
        tb = min((1024, 512, 256),
                 key=lambda c: (_round_up(B8, c) - B8, -c))
    # Shrink until the estimated footprint fits this generation's budget.
    while tb > 8 and weight_bytes + tb * bytes_per_row + (2 << 20) > vmem_budget:
        tb = max(8, _round_up(tb // 2, 8))
    return tb


def _make_fused_mlp_kernel(num_linear: int, neg_slope: float = 0.2):
    """Fused MLP kernel.

    Ref layout: (x_ref, w0, b0, w1, b1, ..., w{L-1}, b{L-1}, o_ref)
      x_ref : [TB, d0_pad]            bf16
      w_i   : [d_i_pad, d_{i+1}_pad]  bf16   (already transposed to [in, out])
      b_i   : [1, d_{i+1}_pad]        f32
      o_ref : [TB, dL_pad]            f32
    """

    def kernel(*refs):
        x_ref = refs[0]
        o_ref = refs[-1]
        x = x_ref[...]  # bf16 [TB, d0_pad]
        for layer in range(num_linear):
            w_ref = refs[1 + 2 * layer]
            b_ref = refs[2 + 2 * layer]
            # bf16 operands, f32 accumulation on the MXU.
            y = jnp.dot(x, w_ref[...], preferred_element_type=jnp.float32)
            y = y + b_ref[...]
            if layer < num_linear - 1:            # no activation on last linear
                y = jnp.maximum(y, neg_slope * y)  # LeakyReLU(0.2)
                x = y.astype(jnp.bfloat16)         # bf16 cross-layer slab
            else:
                o_ref[...] = y.astype(o_ref.dtype)

    return kernel


class MappingNetworkPallas:
    """Mirror of the PyTorch MappingNetwork forward pass (single fused kernel)."""

    def __init__(self, latent_len, hidden_dims, out_dim=256, *, key):
        dims = [latent_len] + list(hidden_dims) + [out_dim * 2]
        self.dims = dims
        self.num_linear = len(dims) - 1
        self.out_features = dims[-1]
        self.pad_dims = [_round_up(d, 128) for d in dims]

        # f32, PyTorch-layout params (kept only for the reference check).
        self.params_f32 = []
        # padded, pre-transposed kernel params: (w [in_pad,out_pad] bf16, b [1,out_pad] f32)
        self.padded_params = []

        for layer in range(self.num_linear):
            fan_in, fan_out = dims[layer], dims[layer + 1]
            key, kw, kb = jax.random.split(key, 3)
            bound = 1.0 / math.sqrt(fan_in)  # roughly PyTorch's default scale
            w = jax.random.uniform(kw, (fan_out, fan_in), jnp.float32, -bound, bound)
            b = jax.random.uniform(kb, (fan_out,), jnp.float32, -bound, bound)
            self.params_f32.append((w, b))

            in_pad, out_pad = self.pad_dims[layer], self.pad_dims[layer + 1]
            w_t = jnp.zeros((in_pad, out_pad), jnp.float32).at[:fan_in, :fan_out].set(w.T)
            b_p = jnp.zeros((1, out_pad), jnp.float32).at[0, :fan_out].set(b)
            self.padded_params.append((w_t.astype(jnp.bfloat16), b_p))

    def __call__(self, latent):
        B, d_in = latent.shape
        assert d_in == self.dims[0], (d_in, self.dims[0])

        d_in_pad = self.pad_dims[0]
        d_out_pad = self.pad_dims[-1]
        max_pad = max(self.pad_dims)

        # Weights/biases are single-buffered (Buffered(1)) and VMEM-resident.
        weight_bytes = sum(
            w.size * w.dtype.itemsize + b.size * b.dtype.itemsize
            for w, b in self.padded_params
        )
        # Per-batch-row VMEM: double-buffered bf16 input tile, double-buffered
        # f32 output tile, plus live f32 + bf16 activation slabs.
        bytes_per_row = 2 * 2 * d_in_pad + 2 * 4 * d_out_pad + 6 * max_pad

        vmem_budget = _vmem_budget_bytes()
        TB = _choose_batch_tile(B, bytes_per_row, weight_bytes, vmem_budget)
        B_pad = _round_up(B, TB)
        grid = (B_pad // TB,)

        # Pad batch & features in bf16 (half the HBM traffic of an f32 pad copy).
        # TODO(synk): for tiny batches the pad/slice XLA ops still dominate;
        # could fold feature padding into the kernel via a VMEM scratch.
        x = jnp.pad(latent.astype(jnp.bfloat16),
                    ((0, B_pad - B), (0, d_in_pad - d_in)))

        in_specs = [pl.BlockSpec((TB, d_in_pad), lambda i: (i, 0))]
        flat_inputs = [x]
        for w, b in self.padded_params:
            # Constant index_map -> fetched once, VMEM-resident for all grid
            # steps; Buffered(1) avoids the default 2x buffer allocation.
            in_specs.append(pl.BlockSpec(w.shape, lambda i: (0, 0),
                                         pipeline_mode=pl.Buffered(1)))
            in_specs.append(pl.BlockSpec(b.shape, lambda i: (0, 0),
                                         pipeline_mode=pl.Buffered(1)))
            flat_inputs.append(w)
            flat_inputs.append(b)
        out_specs = pl.BlockSpec((TB, d_out_pad), lambda i: (i, 0))

        vmem_needed = weight_bytes + TB * bytes_per_row + (2 << 20)
        vmem_limit = int(min(vmem_budget, max(vmem_needed, 16 << 20)))

        flops = 2 * B_pad * sum(self.pad_dims[l] * self.pad_dims[l + 1]
                                for l in range(self.num_linear))
        bytes_accessed = (B_pad * d_in_pad * 2    # bf16 input
                          + weight_bytes          # resident params
                          + B_pad * d_out_pad * 4)  # f32 output
        cost = pl.CostEstimate(flops=flops, transcendentals=0,
                               bytes_accessed=bytes_accessed)

        kernel = _make_fused_mlp_kernel(self.num_linear, neg_slope=0.2)

        out = pl.pallas_call(
            kernel,
            out_shape=jax.ShapeDtypeStruct((B_pad, d_out_pad), jnp.float32),
            grid_spec=pltpu.PrefetchScalarGridSpec(
                num_scalar_prefetch=0,
                grid=grid,
                in_specs=in_specs,
                out_specs=out_specs,
            ),
            compiler_params=pltpu.CompilerParams(
                dimension_semantics=("parallel",),
                vmem_limit_bytes=vmem_limit,
            ),
            cost_estimate=cost,
        )(*flat_inputs)

        # Strip batch / feature padding.
        return out[:B, :self.out_features]


def _reference_forward(latent, params_f32):
    """Plain-JAX f32 reference (PyTorch semantics) for a numerical sanity check."""
    x = latent
    n = len(params_f32)
    for layer, (w, b) in enumerate(params_f32):
        x = x @ w.T + b
        if layer < n - 1:
            x = jnp.where(x > 0, x, 0.2 * x)
    return x


if __name__ == "__main__":
    key = jax.random.PRNGKey(0)
    key_net, key_in = jax.random.split(key)

    # Small, forward-consistent shapes.
    batch = 8
    latent_len = 32
    hidden_dims = [64, 64]
    out_dim = 32  # final layer outputs out_dim * 2 = 64

    net = MappingNetworkPallas(latent_len, hidden_dims, out_dim=out_dim, key=key_net)
    latent = jax.random.normal(key_in, (batch, latent_len), jnp.float32)

    out = jax.block_until_ready(net(latent))

    ref = _reference_forward(latent, net.params_f32)
    assert out.shape == (batch, out_dim * 2), out.shape
    # Kernel matmuls use bf16 operands / bf16 cross-layer activations (f32
    # accumulate), so tolerance is looser than a pure-f32 comparison.
    assert jnp.allclose(out, ref, atol=5e-2, rtol=5e-2), (
        "mismatch vs reference; max abs diff = %s" % float(jnp.max(jnp.abs(out - ref)))
    )

    print("KERNEL_OK")
</pallas_src>

<mosaic_0001>
module attributes {stable_mosaic.version = 11 : i64} {
  func.func @kernel(%arg0: i32, %arg1: memref<8x128xbf16, #tpu.memory_space<vmem>>, %arg2: memref<128x128xbf16, #tpu.memory_space<vmem>>, %arg3: memref<1x128xf32, #tpu.memory_space<vmem>>, %arg4: memref<128x128xbf16, #tpu.memory_space<vmem>>, %arg5: memref<1x128xf32, #tpu.memory_space<vmem>>, %arg6: memref<128x128xbf16, #tpu.memory_space<vmem>>, %arg7: memref<1x128xf32, #tpu.memory_space<vmem>>, %arg8: memref<8x128xf32, #tpu.memory_space<vmem>>) attributes {dimension_semantics = [#tpu.dimension_semantics<parallel>], iteration_bounds = array<i64: 1>, scalar_prefetch = 0 : i64, scratch_operands = 0 : i64, tpu.core_type = #tpu.core_type<tc>, window_params = [{transform_indices = @transform_0, window_bounds = array<i64: 8, 128>}, {pipeline_mode = #tpu.pipeline_mode<synchronous>, transform_indices = @transform_1, window_bounds = array<i64: 128, 128>}, {pipeline_mode = #tpu.pipeline_mode<synchronous>, transform_indices = @transform_2, window_bounds = array<i64: 1, 128>}, {pipeline_mode = #tpu.pipeline_mode<synchronous>, transform_indices = @transform_3, window_bounds = array<i64: 128, 128>}, {pipeline_mode = #tpu.pipeline_mode<synchronous>, transform_indices = @transform_4, window_bounds = array<i64: 1, 128>}, {pipeline_mode = #tpu.pipeline_mode<synchronous>, transform_indices = @transform_5, window_bounds = array<i64: 128, 128>}, {pipeline_mode = #tpu.pipeline_mode<synchronous>, transform_indices = @transform_6, window_bounds = array<i64: 1, 128>}, {transform_indices = @transform_7, window_bounds = array<i64: 8, 128>}]} {
    %c0 = arith.constant 0 : index
    %c0_0 = arith.constant 0 : index
    %0 = vector.load %arg1[%c0, %c0_0] : memref<8x128xbf16, #tpu.memory_space<vmem>>, vector<8x128xbf16>
    %c0_1 = arith.constant 0 : index
    %c0_2 = arith.constant 0 : index
    %1 = vector.load %arg2[%c0_1, %c0_2] : memref<128x128xbf16, #tpu.memory_space<vmem>>, vector<128x128xbf16>
    %cst = arith.constant dense<0.000000e+00> : vector<8x128xf32>
    %2 = tpu.matmul %0, %1, %cst {dimension_numbers = #tpu.dot_dimension_numbers<[1], [0], [0], [1], [0, 0, 1, 1], [], []>} : vector<8x128xbf16>, vector<128x128xbf16>, vector<8x128xf32> -> vector<8x128xf32>
    %c0_3 = arith.constant 0 : index
    %c0_4 = arith.constant 0 : index
    %3 = vector.load %arg3[%c0_3, %c0_4] : memref<1x128xf32, #tpu.memory_space<vmem>>, vector<1x128xf32>
    %4 = vector.broadcast %3 : vector<1x128xf32> to vector<8x128xf32>
    %5 = arith.addf %2, %4 : vector<8x128xf32>
    %cst_5 = arith.constant 2.000000e-01 : f32
    %6 = vector.broadcast %cst_5 : f32 to vector<8x128xf32>
    %7 = arith.mulf %6, %5 : vector<8x128xf32>
    %8 = arith.maximumf %5, %7 : vector<8x128xf32>
    %9 = arith.truncf %8 : vector<8x128xf32> to vector<8x128xbf16>
    %c0_6 = arith.constant 0 : index
    %c0_7 = arith.constant 0 : index
    %10 = vector.load %arg4[%c0_6, %c0_7] : memref<128x128xbf16, #tpu.memory_space<vmem>>, vector<128x128xbf16>
    %cst_8 = arith.constant dense<0.000000e+00> : vector<8x128xf32>
    %11 = tpu.matmul %9, %10, %cst_8 {dimension_numbers = #tpu.dot_dimension_numbers<[1], [0], [0], [1], [0, 0, 1, 1], [], []>} : vector<8x128xbf16>, vector<128x128xbf16>, vector<8x128xf32> -> vector<8x128xf32>
    %c0_9 = arith.constant 0 : index
    %c0_10 = arith.constant 0 : index
    %12 = vector.load %arg5[%c0_9, %c0_10] : memref<1x128xf32, #tpu.memory_space<vmem>>, vector<1x128xf32>
    %13 = vector.broadcast %12 : vector<1x128xf32> to vector<8x128xf32>
    %14 = arith.addf %11, %13 : vector<8x128xf32>
    %cst_11 = arith.constant 2.000000e-01 : f32
    %15 = vector.broadcast %cst_11 : f32 to vector<8x128xf32>
    %16 = arith.mulf %15, %14 : vector<8x128xf32>
    %17 = arith.maximumf %14, %16 : vector<8x128xf32>
    %18 = arith.truncf %17 : vector<8x128xf32> to vector<8x128xbf16>
    %c0_12 = arith.constant 0 : index
    %c0_13 = arith.constant 0 : index
    %19 = vector.load %arg6[%c0_12, %c0_13] : memref<128x128xbf16, #tpu.memory_space<vmem>>, vector<128x128xbf16>
    %cst_14 = arith.constant dense<0.000000e+00> : vector<8x128xf32>
    %20 = tpu.matmul %18, %19, %cst_14 {dimension_numbers = #tpu.dot_dimension_numbers<[1], [0], [0], [1], [0, 0, 1, 1], [], []>} : vector<8x128xbf16>, vector<128x128xbf16>, vector<8x128xf32> -> vector<8x128xf32>
    %c0_15 = arith.constant 0 : index
    %c0_16 = arith.constant 0 : index
    %21 = vector.load %arg7[%c0_15, %c0_16] : memref<1x128xf32, #tpu.memory_space<vmem>>, vector<1x128xf32>
    %22 = vector.broadcast %21 : vector<1x128xf32> to vector<8x128xf32>
    %23 = arith.addf %20, %22 : vector<8x128xf32>
    %c0_17 = arith.constant 0 : index
    %c0_18 = arith.constant 0 : index
    %24 = vector.load %arg8[%c0_17, %c0_18] : memref<8x128xf32, #tpu.memory_space<vmem>>, vector<8x128xf32>
    tpu.vector_store %arg8[%c0_17, %c0_18], %23 {strides = array<i32>} : memref<8x128xf32, #tpu.memory_space<vmem>>, vector<8x128xf32>,
    return
  }
  func.func @transform_0(%arg0: i32) -> (i32, i32) {
    %c0_i32 = arith.constant 0 : i32
    %c0_i32_0 = arith.constant 0 : i32
    return %arg0, %c0_i32 : i32, i32
  }
  func.func @transform_1(%arg0: i32) -> (i32, i32) {
    %c0_i32 = arith.constant 0 : i32
    %c0_i32_0 = arith.constant 0 : i32
    %c0_i32_1 = arith.constant 0 : i32
    return %c0_i32, %c0_i32_0 : i32, i32
  }
  func.func @transform_2(%arg0: i32) -> (i32, i32) {
    %c0_i32 = arith.constant 0 : i32
    %c0_i32_0 = arith.constant 0 : i32
    %c0_i32_1 = arith.constant 0 : i32
    return %c0_i32, %c0_i32_0 : i32, i32
  }
  func.func @transform_3(%arg0: i32) -> (i32, i32) {
    %c0_i32 = arith.constant 0 : i32
    %c0_i32_0 = arith.constant 0 : i32
    %c0_i32_1 = arith.constant 0 : i32
    return %c0_i32, %c0_i32_0 : i32, i32
  }
  func.func @transform_4(%arg0: i32) -> (i32, i32) {
    %c0_i32 = arith.constant 0 : i32
    %c0_i32_0 = arith.constant 0 : i32
    %c0_i32_1 = arith.constant 0 : i32
    return %c0_i32, %c0_i32_0 : i32, i32
  }
  func.func @transform_5(%arg0: i32) -> (i32, i32) {
    %c0_i32 = arith.constant 0 : i32
    %c0_i32_0 = arith.constant 0 : i32
    %c0_i32_1 = arith.constant 0 : i32
    return %c0_i32, %c0_i32_0 : i32, i32
  }
  func.func @transform_6(%arg0: i32) -> (i32, i32) {
    %c0_i32 = arith.constant 0 : i32
    %c0_i32_0 = arith.constant 0 : i32
    %c0_i32_1 = arith.constant 0 : i32
    return %c0_i32, %c0_i32_0 : i32, i32
  }
  func.func @transform_7(%arg0: i32) -> (i32, i32) {
    %c0_i32 = arith.constant 0 : i32
    %c0_i32_0 = arith.constant 0 : i32
    return %arg0, %c0_i32 : i32, i32
  }
}

</mosaic_0001>

<llo_original>
// kernel: tpu_custom_call.1
$region0: #{tpu_custom_call.1}
  #allocation0 [shape = 'u32[]', space=smem, size = 0x4, offset = 0x4, fixed_abs, tag = 'smem constant byte address 0x4 - core index']
  #allocation1 [shape = 'u32[144,128]{1,0:T(1,128)}', space=vmem, size = 0x12000, scoped, tag = 'internal scratch']
  %s0 = inlined_call_operand.hbm [shape: bf16[8,128], index: 0, kind: input, shape index: {}]
  %s1 = inlined_call_operand.hbm [shape: bf16[128,128], index: 1, kind: input, shape index: {}]
  %s2 = inlined_call_operand.vmem [shape: f32[1,128], index: 2, kind: input, shape index: {}]
  %s3 = inlined_call_operand.hbm [shape: bf16[128,128], index: 3, kind: input, shape index: {}]
  %s4 = inlined_call_operand.vmem [shape: f32[1,128], index: 4, kind: input, shape index: {}]
  %s5 = inlined_call_operand.hbm [shape: bf16[128,128], index: 5, kind: input, shape index: {}]
  %s6 = inlined_call_operand.vmem [shape: f32[1,128], index: 6, kind: input, shape index: {}]
  %s7 = inlined_call_operand.hbm [shape: f32[8,128], index: 7, kind: output, shape index: {}]
  %s8 = sld [smem:[#allocation0]]
  $region54: #{tpu_custom_call.1} parent=0
    _
  %s10 = ssub.s32 1, %s8
  %s11 = scalar_select 0, %s10, %s8
  $region1: #{tpu_custom_call.1} parent=0
    #allocation2 [shape = 'u8[2048]{0}', space=vmem, size = 0x800, scoped, tag = 'input window, operand 0, single buffered']
    #allocation3 [shape = 's32[1]{0}', space=sflag, size = 0x4, scoped, tag = 'scoped memory for tpu_custom_call.1']
    #allocation4 [shape = 's32[1]{0}', space=sflag, size = 0x4, scoped, tag = 'scoped memory for tpu_custom_call.1']
    #allocation5 [shape = 'u8[32768]{0}', space=vmem, size = 0x8000, scoped, tag = 'input window, operand 1, single buffered']
    #allocation6 [shape = 's32[1]{0}', space=sflag, size = 0x4, scoped, tag = 'scoped memory for tpu_custom_call.1']
    #allocation7 [shape = 'u8[32768]{0}', space=vmem, size = 0x8000, scoped, tag = 'input window, operand 3, single buffered']
    #allocation8 [shape = 'u8[32768]{0}', space=vmem, size = 0x8000, scoped, tag = 'input window, operand 5, single buffered']
    #allocation9 [shape = 's32[1]{0}', space=sflag, size = 0x4, scoped, tag = 'scoped memory for tpu_custom_call.1']
    #allocation10 [shape = 'u8[4096]{0}', space=vmem, size = 0x1000, scoped, tag = 'output window, operand 0, single buffered']
    %12 = vsyncpa [#allocation3], 0
    %13 = vsyncpa [#allocation6], 0
    %14 = vsyncpa [#allocation9], 0
    %15 = vsyncpa [#allocation4], 0
    // Predicated region
    $region2: #{tpu_custom_call.1} parent=1 // pred_check
      _
    $region3: #{tpu_custom_call.1} parent=1 // pred_check_branch
      %17 = sbr.rel (0) target = $region5
    $region4: #{tpu_custom_call.1} parent=1 // pred_region
      %s19 = ssub.s32 64, 64
      %20 = vsyncadd [#allocation3], %s19
      %s22 = sshll.u32 [#allocation2], 4
      %s23 = int_to_ptr.vmem [resolvable:$true] %s22
      %25 = dma.hbm_to_vmem [thread:$0]  %s0, 64, %s23, [#allocation3]
    $region5: #{tpu_custom_call.1} parent=1 // pred_fallthru
      _
    // Predicated region
    $region6: #{tpu_custom_call.1} parent=1 // pred_check
      _
    $region7: #{tpu_custom_call.1} parent=1 // pred_check_branch
      %27 = sbr.rel (0) target = $region9
    $region8: #{tpu_custom_call.1} parent=1 // pred_region
      %s29 = ssub.s32 1024, 1024
      %30 = vsyncadd [#allocation6], %s29
      %s31 = sshll.u32 [#allocation5], 4
      %s32 = int_to_ptr.vmem [resolvable:$true] %s31
      %37 = dma.hbm_to_vmem [thread:$0]  %s1, 1024, %s32, [#allocation6], 64, 64, 4
    $region9: #{tpu_custom_call.1} parent=1 // pred_fallthru
      _
    // Predicated region
    $region10: #{tpu_custom_call.1} parent=1 // pred_check
      _
    $region11: #{tpu_custom_call.1} parent=1 // pred_check_branch
      %39 = sbr.rel (0) target = $region13
    $region12: #{tpu_custom_call.1} parent=1 // pred_region
      _
    $region13: #{tpu_custom_call.1} parent=1 // pred_fallthru
      _
    // Predicated region
    $region14: #{tpu_custom_call.1} parent=1 // pred_check
      _
    $region15: #{tpu_custom_call.1} parent=1 // pred_check_branch
      %41 = sbr.rel (0) target = $region17
    $region16: #{tpu_custom_call.1} parent=1 // pred_region
      %s43 = ssub.s32 1024, 1024
      %44 = vsyncadd [#allocation6], %s43
      %s45 = sshll.u32 [#allocation7], 4
      %s46 = int_to_ptr.vmem [resolvable:$true] %s45
      %51 = dma.hbm_to_vmem [thread:$0]  %s3, 1024, %s46, [#allocation6], 64, 64, 4
    $region17: #{tpu_custom_call.1} parent=1 // pred_fallthru
      _
    // Predicated region
    $region18: #{tpu_custom_call.1} parent=1 // pred_check
      _
    $region19: #{tpu_custom_call.1} parent=1 // pred_check_branch
      %53 = sbr.rel (0) target = $region21
    $region20: #{tpu_custom_call.1} parent=1 // pred_region
      _
    $region21: #{tpu_custom_call.1} parent=1 // pred_fallthru
      _
    // Predicated region
    $region22: #{tpu_custom_call.1} parent=1 // pred_check
      _
    $region23: #{tpu_custom_call.1} parent=1 // pred_check_branch
      %55 = sbr.rel (0) target = $region25
    $region24: #{tpu_custom_call.1} parent=1 // pred_region
      %s57 = ssub.s32 1024, 1024
      %58 = vsyncadd [#allocation9], %s57
      %s59 = sshll.u32 [#allocation8], 4
      %s60 = int_to_ptr.vmem [resolvable:$true] %s59
      %65 = dma.hbm_to_vmem [thread:$0]  %s5, 1024, %s60, [#allocation9], 64, 64, 4
    $region25: #{tpu_custom_call.1} parent=1 // pred_fallthru
      _
    // Predicated region
    $region26: #{tpu_custom_call.1} parent=1 // pred_check
      _
    $region27: #{tpu_custom_call.1} parent=1 // pred_check_branch
      %67 = sbr.rel (0) target = $region29
    $region28: #{tpu_custom_call.1} parent=1 // pred_region
      _
    $region29: #{tpu_custom_call.1} parent=1 // pred_fallthru
      _
    // Predicated region
    $region30: #{tpu_custom_call.1} parent=1 // pred_check
      _
    $region31: #{tpu_custom_call.1} parent=1 // pred_check_branch
      %69 = sbr.rel (0) target = $region33
    $region32: #{tpu_custom_call.1} parent=1 // pred_region
      %70 = dma.done [#allocation3], 64
    $region33: #{tpu_custom_call.1} parent=1 // pred_fallthru
      _
    // Predicated region
    $region34: #{tpu_custom_call.1} parent=1 // pred_check
      _
    $region35: #{tpu_custom_call.1} parent=1 // pred_check_branch
      %72 = sbr.rel (0) target = $region37
    $region36: #{tpu_custom_call.1} parent=1 // pred_region
      %73 = dma.done [#allocation6], 1024
    $region37: #{tpu_custom_call.1} parent=1 // pred_fallthru
      _
    // Predicated region
    $region38: #{tpu_custom_call.1} parent=1 // pred_check
      _
    $region39: #{tpu_custom_call.1} parent=1 // pred_check_branch
      %75 = sbr.rel (0) target = $region41
    $region40: #{tpu_custom_call.1} parent=1 // pred_region
      %76 = dma.done [#allocation6], 1024
    $region41: #{tpu_custom_call.1} parent=1 // pred_fallthru
      _
    // Predicated region
    $region42: #{tpu_custom_call.1} parent=1 // pred_check
      _
    $region43: #{tpu_custom_call.1} parent=1 // pred_check_branch
      %78 = sbr.rel (0) target = $region45
    $region44: #{tpu_custom_call.1} parent=1 // pred_region
      %79 = dma.done [#allocation9], 1024
    $region45: #{tpu_custom_call.1} parent=1 // pred_fallthru
      _
    %v81 = vld [vmem:[#allocation2] sm:$0xf]
    %v82 = vld [vmem:[#allocation5] sm:$0xf]
    %v83 = vld [vmem:[#allocation5 + $0x4] sm:$0xf]
    %v84 = vld [vmem:[#allocation5 + $0x8] sm:$0xf]
    %v85 = vld [vmem:[#allocation5 + $0xc] sm:$0xf]
    %v86 = vld [vmem:[#allocation5 + $0x10] sm:$0xf]
    %v87 = vld [vmem:[#allocation5 + $0x14] sm:$0xf]
    %v88 = vld [vmem:[#allocation5 + $0x18] sm:$0xf]
    %v89 = vld [vmem:[#allocation5 + $0x1c] sm:$0xf]
    %v90 = vld [vmem:[#allocation5 + $0x20] sm:$0xf]
    %v91 = vld [vmem:[#allocation5 + $0x24] sm:$0xf]
    %v92 = vld [vmem:[#allocation5 + $0x28] sm:$0xf]
    %v93 = vld [vmem:[#allocation5 + $0x2c] sm:$0xf]
    %v94 = vld [vmem:[#allocation5 + $0x30] sm:$0xf]
    %v95 = vld [vmem:[#allocation5 + $0x34] sm:$0xf]
    %v96 = vld [vmem:[#allocation5 + $0x38] sm:$0xf]
    %v97 = vld [vmem:[#allocation5 + $0x3c] sm:$0xf]
    %v98 = vld [vmem:[%s2] sm:$0x1]
    %v100 = vlaneseq
    %v101 = vshrl.u32 %v100, 7
    %v102 = vsub.s32 0, %v101
    %v103 = vrot.slane %v98, %v102
    %v121 = vunpack.c.l.b16 %v82
    %v122 = vunpack.c.l.b16 %v83
    %v123 = vunpack.c.l.b16 %v84
    %v124 = vunpack.c.l.b16 %v85
    %v125 = vunpack.c.l.b16 %v86
    %v126 = vunpack.c.l.b16 %v87
    %v127 = vunpack.c.l.b16 %v88
    %v128 = vunpack.c.l.b16 %v89
    %v129 = vunpack.c.l.b16 %v90
    %v130 = vunpack.c.l.b16 %v91
    %v131 = vunpack.c.l.b16 %v92
    %v132 = vunpack.c.l.b16 %v93
    %v133 = vunpack.c.l.b16 %v94
    %v134 = vunpack.c.l.b16 %v95
    %v135 = vunpack.c.l.b16 %v96
    %v136 = vunpack.c.l.b16 %v97
    %v137 = vpack.c.b16 %v122, %v121
    %v138 = vpack.c.b16 %v124, %v123
    %v139 = vpack.c.b16 %v126, %v125
    %v140 = vpack.c.b16 %v128, %v127
    %v141 = vpack.c.b16 %v130, %v129
    %v142 = vpack.c.b16 %v132, %v131
    %v143 = vpack.c.b16 %v134, %v133
    %v144 = vpack.c.b16 %v136, %v135
    %153 = vmatprep.subr.bf16.mxu0 0
    %154 = vmatpush1.bf16.msra.mxu0 %v137
    %155 = vmatprep.subr.bf16.mxu0 0
    %156 = vmatpush1.bf16.msra.mxu0 %v138
    %157 = vmatprep.subr.bf16.mxu0 0
    %158 = vmatpush1.bf16.msra.mxu0 %v139
    %159 = vmatprep.subr.bf16.mxu0 0
    %160 = vmatpush1.bf16.msra.mxu0 %v140
    %161 = vmatprep.subr.bf16.mxu0 0
    %162 = vmatpush1.bf16.msra.mxu0 %v141
    %163 = vmatprep.subr.bf16.mxu0 0
    %164 = vmatpush1.bf16.msra.mxu0 %v142
    %165 = vmatprep.subr.bf16.mxu0 0
    %166 = vmatpush1.bf16.msra.mxu0 %v143
    %167 = vmatprep.subr.bf16.mxu0 0
    %168 = vmatpush1.bf16.msra.mxu0 %v144
    %169 = vmatprep.subr.bf16.mxu0 0
    %170 = vmatpush1.bf16.msra.mxu0 0
    %171 = vmatprep.subr.bf16.mxu0 0
    %172 = vmatpush1.bf16.msra.mxu0 0
    %173 = vmatprep.subr.bf16.mxu0 0
    %174 = vmatpush1.bf16.msra.mxu0 0
    %175 = vmatprep.subr.bf16.mxu0 0
    %176 = vmatpush1.bf16.msra.mxu0 0
    %177 = vmatprep.subr.bf16.mxu0 0
    %178 = vmatpush1.bf16.msra.mxu0 0
    %179 = vmatprep.subr.bf16.mxu0 0
    %180 = vmatpush1.bf16.msra.mxu0 0
    %181 = vmatprep.subr.bf16.mxu0 0
    %182 = vmatpush1.bf16.msra.mxu0 0
    %183 = vmatprep.subr.bf16.mxu0 0
    %184 = vmatpush1.bf16.msra.mxu0 0
    %185 = vmatprep.mubr.bf16.mxu0 0
    %186 = vmatmul.mubr.bf16.gmra.mrb[0].mxu0 %v81
    %v187 = vpop.f32.mrb[0].mxu0
    %v188 = vadd.f32 %v103, %v187
    %v189 = vpop.f32.mrb[0].mxu0
    %v190 = vpop.f32.mrb[0].mxu0
    %v191 = vpop.f32.mrb[0].mxu0
    %192 = vdwg.mxu0
    %v193 = vmul.f32 %v188, 0.2
    %v194 = vmax.f32 %v188, %v193
    %v195 = vpack.c.bf16 %v194, %v194
    %v196 = vld [vmem:[#allocation7] sm:$0xf]
    %v197 = vld [vmem:[#allocation7 + $0x4] sm:$0xf]
    %v198 = vld [vmem:[#allocation7 + $0x8] sm:$0xf]
    %v199 = vld [vmem:[#allocation7 + $0xc] sm:$0xf]
    %v200 = vld [vmem:[#allocation7 + $0x10] sm:$0xf]
    %v201 = vld [vmem:[#allocation7 + $0x14] sm:$0xf]
    %v202 = vld [vmem:[#allocation7 + $0x18] sm:$0xf]
    %v203 = vld [vmem:[#allocation7 + $0x1c] sm:$0xf]
    %v204 = vld [vmem:[#allocation7 + $0x20] sm:$0xf]
    %v205 = vld [vmem:[#allocation7 + $0x24] sm:$0xf]
    %v206 = vld [vmem:[#allocation7 + $0x28] sm:$0xf]
    %v207 = vld [vmem:[#allocation7 + $0x2c] sm:$0xf]
    %v208 = vld [vmem:[#allocation7 + $0x30] sm:$0xf]
    %v209 = vld [vmem:[#allocation7 + $0x34] sm:$0xf]
    %v210 = vld [vmem:[#allocation7 + $0x38] sm:$0xf]
    %v211 = vld [vmem:[#allocation7 + $0x3c] sm:$0xf]
    %v212 = vld [vmem:[%s4] sm:$0x1]
    %v214 = vlaneseq
    %v215 = vshrl.u32 %v214, 7
    %v216 = vsub.s32 0, %v215
    %v217 = vrot.slane %v212, %v216
    %v235 = vunpack.c.l.b16 %v196
    %v236 = vunpack.c.l.b16 %v197
    %v237 = vunpack.c.l.b16 %v198
    %v238 = vunpack.c.l.b16 %v199
    %v239 = vunpack.c.l.b16 %v200
    %v240 = vunpack.c.l.b16 %v201
    %v241 = vunpack.c.l.b16 %v202
    %v242 = vunpack.c.l.b16 %v203
    %v243 = vunpack.c.l.b16 %v204
    %v244 = vunpack.c.l.b16 %v205
    %v245 = vunpack.c.l.b16 %v206
    %v246 = vunpack.c.l.b16 %v207
    %v247 = vunpack.c.l.b16 %v208
    %v248 = vunpack.c.l.b16 %v209
    %v249 = vunpack.c.l.b16 %v210
    %v250 = vunpack.c.l.b16 %v211
    %v251 = vpack.c.b16 %v236, %v235
    %v252 = vpack.c.b16 %v238, %v237
    %v253 = vpack.c.b16 %v240, %v239
    %v254 = vpack.c.b16 %v242, %v241
    %v255 = vpack.c.b16 %v244, %v243
    %v256 = vpack.c.b16 %v246, %v245
    %v257 = vpack.c.b16 %v248, %v247
    %v258 = vpack.c.b16 %v250, %v249
    %267 = vmatprep.subr.bf16.mxu0 0
    %268 = vmatpush1.bf16.msra.mxu0 %v251
    %269 = vmatprep.subr.bf16.mxu0 0
    %270 = vmatpush1.bf16.msra.mxu0 %v252
    %271 = vmatprep.subr.bf16.mxu0 0
    %272 = vmatpush1.bf16.msra.mxu0 %v253
    %273 = vmatprep.subr.bf16.mxu0 0
    %274 = vmatpush1.bf16.msra.mxu0 %v254
    %275 = vmatprep.subr.bf16.mxu0 0
    %276 = vmatpush1.bf16.msra.mxu0 %v255
    %277 = vmatprep.subr.bf16.mxu0 0
    %278 = vmatpush1.bf16.msra.mxu0 %v256
    %279 = vmatprep.subr.bf16.mxu0 0
    %280 = vmatpush1.bf16.msra.mxu0 %v257
    %281 = vmatprep.subr.bf16.mxu0 0
    %282 = vmatpush1.bf16.msra.mxu0 %v258
    %283 = vmatprep.subr.bf16.mxu0 0
    %284 = vmatpush1.bf16.msra.mxu0 0
    %285 = vmatprep.subr.bf16.mxu0 0
    %286 = vmatpush1.bf16.msra.mxu0 0
    %287 = vmatprep.subr.bf16.mxu0 0
    %288 = vmatpush1.bf16.msra.mxu0 0
    %289 = vmatprep.subr.bf16.mxu0 0
    %290 = vmatpush1.bf16.msra.mxu0 0
    %291 = vmatprep.subr.bf16.mxu0 0
    %292 = vmatpush1.bf16.msra.mxu0 0
    %293 = vmatprep.subr.bf16.mxu0 0
    %294 = vmatpush1.bf16.msra.mxu0 0
    %295 = vmatprep.subr.bf16.mxu0 0
    %296 = vmatpush1.bf16.msra.mxu0 0
    %297 = vmatprep.subr.bf16.mxu0 0
    %298 = vmatpush1.bf16.msra.mxu0 0
    %299 = vmatprep.mubr.bf16.mxu0 0
    %300 = vmatmul.mubr.bf16.gmra.mrb[0].mxu0 %v195
    %v301 = vpop.f32.mrb[0].mxu0
    %v302 = vadd.f32 %v217, %v301
    %v303 = vpop.f32.mrb[0].mxu0
    %v304 = vpop.f32.mrb[0].mxu0
    %v305 = vpop.f32.mrb[0].mxu0
    %306 = vdwg.mxu0
    %v307 = vmul.f32 %v302, 0.2
    %v308 = vmax.f32 %v302, %v307
    %v309 = vpack.c.bf16 %v308, %v308
    %v310 = vld [vmem:[#allocation8] sm:$0xf]
    %v311 = vld [vmem:[#allocation8 + $0x4] sm:$0xf]
    %v312 = vld [vmem:[#allocation8 + $0x8] sm:$0xf]
    %v313 = vld [vmem:[#allocation8 + $0xc] sm:$0xf]
    %v314 = vld [vmem:[#allocation8 + $0x10] sm:$0xf]
    %v315 = vld [vmem:[#allocation8 + $0x14] sm:$0xf]
    %v316 = vld [vmem:[#allocation8 + $0x18] sm:$0xf]
    %v317 = vld [vmem:[#allocation8 + $0x1c] sm:$0xf]
    %v318 = vld [vmem:[#allocation8 + $0x20] sm:$0xf]
    %v319 = vld [vmem:[#allocation8 + $0x24] sm:$0xf]
    %v320 = vld [vmem:[#allocation8 + $0x28] sm:$0xf]
    %v321 = vld [vmem:[#allocation8 + $0x2c] sm:$0xf]
    %v322 = vld [vmem:[#allocation8 + $0x30] sm:$0xf]
    %v323 = vld [vmem:[#allocation8 + $0x34] sm:$0xf]
    %v324 = vld [vmem:[#allocation8 + $0x38] sm:$0xf]
    %v325 = vld [vmem:[#allocation8 + $0x3c] sm:$0xf]
    %v326 = vld [vmem:[%s6] sm:$0x1]
    %v328 = vlaneseq
    %v329 = vshrl.u32 %v328, 7
    %v330 = vsub.s32 0, %v329
    %v331 = vrot.slane %v326, %v330
    %v349 = vunpack.c.l.b16 %v310
    %v350 = vunpack.c.l.b16 %v311
    %v351 = vunpack.c.l.b16 %v312
    %v352 = vunpack.c.l.b16 %v313
    %v353 = vunpack.c.l.b16 %v314
    %v354 = vunpack.c.l.b16 %v315
    %v355 = vunpack.c.l.b16 %v316
    %v356 = vunpack.c.l.b16 %v317
    %v357 = vunpack.c.l.b16 %v318
    %v358 = vunpack.c.l.b16 %v319
    %v359 = vunpack.c.l.b16 %v320
    %v360 = vunpack.c.l.b16 %v321
    %v361 = vunpack.c.l.b16 %v322
    %v362 = vunpack.c.l.b16 %v323
    %v363 = vunpack.c.l.b16 %v324
    %v364 = vunpack.c.l.b16 %v325
    %v365 = vpack.c.b16 %v350, %v349
    %v366 = vpack.c.b16 %v352, %v351
    %v367 = vpack.c.b16 %v354, %v353
    %v368 = vpack.c.b16 %v356, %v355
    %v369 = vpack.c.b16 %v358, %v357
    %v370 = vpack.c.b16 %v360, %v359
    %v371 = vpack.c.b16 %v362, %v361
    %v372 = vpack.c.b16 %v364, %v363
    %381 = vmatprep.subr.bf16.mxu0 0
    %382 = vmatpush1.bf16.msra.mxu0 %v365
    %383 = vmatprep.subr.bf16.mxu0 0
    %384 = vmatpush1.bf16.msra.mxu0 %v366
    %385 = vmatprep.subr.bf16.mxu0 0
    %386 = vmatpush1.bf16.msra.mxu0 %v367
    %387 = vmatprep.subr.bf16.mxu0 0
    %388 = vmatpush1.bf16.msra.mxu0 %v368
    %389 = vmatprep.subr.bf16.mxu0 0
    %390 = vmatpush1.bf16.msra.mxu0 %v369
    %391 = vmatprep.subr.bf16.mxu0 0
    %392 = vmatpush1.bf16.msra.mxu0 %v370
    %393 = vmatprep.subr.bf16.mxu0 0
    %394 = vmatpush1.bf16.msra.mxu0 %v371
    %395 = vmatprep.subr.bf16.mxu0 0
    %396 = vmatpush1.bf16.msra.mxu0 %v372
    %397 = vmatprep.subr.bf16.mxu0 0
    %398 = vmatpush1.bf16.msra.mxu0 0
    %399 = vmatprep.subr.bf16.mxu0 0
    %400 = vmatpush1.bf16.msra.mxu0 0
    %401 = vmatprep.subr.bf16.mxu0 0
    %402 = vmatpush1.bf16.msra.mxu0 0
    %403 = vmatprep.subr.bf16.mxu0 0
    %404 = vmatpush1.bf16.msra.mxu0 0
    %405 = vmatprep.subr.bf16.mxu0 0
    %406 = vmatpush1.bf16.msra.mxu0 0
    %407 = vmatprep.subr.bf16.mxu0 0
    %408 = vmatpush1.bf16.msra.mxu0 0
    %409 = vmatprep.subr.bf16.mxu0 0
    %410 = vmatpush1.bf16.msra.mxu0 0
    %411 = vmatprep.subr.bf16.mxu0 0
    %412 = vmatpush1.bf16.msra.mxu0 0
    %413 = vmatprep.mubr.bf16.mxu0 0
    %414 = vmatmul.mubr.bf16.gmra.mrb[0].mxu0 %v309
    %v415 = vpop.f32.mrb[0].mxu0
    %v416 = vadd.f32 %v331, %v415
    %v417 = vpop.f32.mrb[0].mxu0
    %v418 = vpop.f32.mrb[0].mxu0
    %v419 = vpop.f32.mrb[0].mxu0
    %420 = vdwg.mxu0
    %421 = vst [vmem:[#allocation10] sm:$0xff] %v416
    // Predicated region
    $region46: #{tpu_custom_call.1} parent=1 // pred_check
      _
    $region47: #{tpu_custom_call.1} parent=1 // pred_check_branch
      %423 = sbr.rel (0) target = $region49
    $region48: #{tpu_custom_call.1} parent=1 // pred_region
      %s425 = ssub.s32 128, 128
      %426 = vsyncadd [#allocation4], %s425
      %s428 = sshll.u32 [#allocation10], 4
      %s429 = int_to_ptr.vmem [resolvable:$true] %s428
      %431 = dma.vmem_to_hbm [thread:$0]  %s429, 128, %s7, [#allocation4]
    $region49: #{tpu_custom_call.1} parent=1 // pred_fallthru
      _
    // Predicated region
    $region50: #{tpu_custom_call.1} parent=1 // pred_check
      _
    $region51: #{tpu_custom_call.1} parent=1 // pred_check_branch
      %433 = sbr.rel (0) target = $region53
    $region52: #{tpu_custom_call.1} parent=1 // pred_region
      %434 = dma.done [#allocation4], 128
    $region53: #{tpu_custom_call.1} parent=1 // pred_fallthru
      _
    %435 = vsyncpa [#allocation3], 1
    %436 = vsyncpa [#allocation6], 1
    %437 = vsyncpa [#allocation9], 1
    %438 = vsyncpa [#allocation4], 1

</llo_original>
